<compile_context>
chip_gen: v6e
topology: v6e:2x2x1
jax: 0.10.0
libtpu: 0.0.40
codegen_flags: <defaults>
</compile_context>

<pallas_src>
import jax
import jax.numpy as jnp
from jax.experimental import pallas as pl
from jax.experimental.pallas import tpu as pltpu

_LANE = 128
_SUBLANE = 8


def _make_fuse_kernel(num_others, use_mxu):
    """Build a kernel for a fixed (static) number of shared sides."""

    def kernel(*refs):
        # refs = side5, other_0..other_{K-1}, weight, bias, out
        side5_ref = refs[0]
        other_refs = refs[1:1 + num_others]
        w_ref = refs[1 + num_others]
        b_ref = refs[2 + num_others]
        out_ref = refs[3 + num_others]

        w = w_ref[...]                              # (C, S)  already f32
        b = b_ref[...]                              # (C, 1)  already f32
        s5 = side5_ref[...].astype(jnp.float32)     # (C, T)

        # side5 term + bias: pure VPU FMAs.
        acc = w[:, 0:1] * s5 + b                    # (C, T)

        if num_others > 0:
            if use_mxu:
                # Stack the (1, T) shared sides into an (8, T) tile (zero
                # padded) and combine with one small MXU matmul; keeps the
                # VALU/vld slots free on v7x / bf16-v6e.
                t = s5.shape[-1]
                c = w.shape[0]
                rows = [r[...].astype(jnp.float32) for r in other_refs]
                pad_rows = (-num_others) % _SUBLANE
                if pad_rows:
                    rows.append(jnp.zeros((pad_rows, t), jnp.float32))
                stack = jnp.concatenate(rows, axis=0)        # (K8, T)
                w_oth = w[:, 1:]                             # (C, S-1)
                if pad_rows:
                    w_oth = jnp.concatenate(
                        [w_oth, jnp.zeros((c, pad_rows), jnp.float32)], axis=1)
                acc = acc + jnp.dot(w_oth, stack,
                                    preferred_element_type=jnp.float32)
            else:
                # Statically unrolled VPU FMAs (S is tiny); no MXU needed
                # while the kernel is HBM-bound (v5e / f32-v6e).
                for k in range(num_others):
                    ok = other_refs[k][...].astype(jnp.float32)   # (1, T)
                    acc = acc + w[:, k + 1:k + 2] * ok

        out_ref[...] = acc.astype(out_ref.dtype)

    return kernel


def _choose_tile(hw, n_batch, *, max_tile=8192, min_steps=8):
    """Lane-multiple tile: as large as possible (<= max_tile), but shrunk so
    that n_batch * cdiv(hw, tile) gives at least ~min_steps grid steps."""
    hw_blocks = pl.cdiv(hw, _LANE)
    tile_blocks = max(1, min(max_tile // _LANE, hw_blocks))
    need_tiles = pl.cdiv(min_steps, max(1, n_batch))
    if pl.cdiv(hw_blocks, tile_blocks) < need_tiles:
        tile_blocks = max(1, hw_blocks // need_tiles)
    return tile_blocks * _LANE


def grouped_conv_fuse(sides, weight, bias=None, *, max_tile=8192,
                      min_steps=8, use_mxu=False):
    """Pallas implementation of GroupedConvFuse.forward.

    sides : list of NCHW arrays; sides[:-1] have 1 channel, sides[-1] has
            num_classes channels.  bf16 I/O recommended on v5e/v6e (HBM-bound);
            accumulation is always f32 in-kernel.
    weight: (num_classes, num_sides) or (num_classes, num_sides, 1, 1) —
            grouped 1x1 conv weight.
    bias  : (num_classes,) or None (bias=False in the module).
    use_mxu: offload the shared-side combination to the MXU (v7x / bf16-v6e).
    """
    side5 = sides[-1]
    others = list(sides[:-1])
    N, C, H, W = side5.shape
    S = len(sides)
    num_others = S - 1
    HW = H * W
    for o in others:
        assert o.shape == (N, 1, H, W), "shared sides must be 1-channel NCHW"

    tile = _choose_tile(HW, N, max_tile=max_tile, min_steps=min_steps)
    num_tiles = pl.cdiv(HW, tile)

    # Free reshapes only — no pad, no extra HBM traffic.
    side5_f = side5.reshape(N, C, HW)
    others_f = [o.reshape(N, 1, HW) for o in others]

    # Hoist weight/bias f32 casts out of the kernel (tiny, VMEM-resident).
    w_f = weight.reshape(C, S).astype(jnp.float32)
    if bias is None:
        b_f = jnp.zeros((C, 1), jnp.float32)
    else:
        b_f = bias.reshape(C, 1).astype(jnp.float32)

    kernel = _make_fuse_kernel(num_others, use_mxu)

    in_specs = (
        [pl.BlockSpec((pl.Squeezed(), C, tile), lambda n, t: (n, 0, t))]
        + [pl.BlockSpec((pl.Squeezed(), 1, tile), lambda n, t: (n, 0, t))
           for _ in range(num_others)]
        + [pl.BlockSpec((C, S), lambda n, t: (0, 0)),
           pl.BlockSpec((C, 1), lambda n, t: (0, 0))]
    )
    out_spec = pl.BlockSpec((pl.Squeezed(), C, tile), lambda n, t: (n, 0, t))

    out = pl.pallas_call(
        kernel,
        out_shape=jax.ShapeDtypeStruct((N, C, HW), side5.dtype),
        grid_spec=pltpu.PrefetchScalarGridSpec(
            num_scalar_prefetch=0,
            grid=(N, num_tiles),
            in_specs=in_specs,
            out_specs=out_spec,
        ),
        compiler_params=pltpu.CompilerParams(
            dimension_semantics=("parallel", "parallel")),
    )(side5_f, *others_f, w_f, b_f)

    return out.reshape(N, C, H, W)


def grouped_conv_fuse_ref(sides, weight, bias=None):
    """Pure-JAX reference matching the PyTorch forward exactly (f32 math)."""
    side5 = sides[-1]
    others = sides[:-1]
    N, C, H, W = side5.shape
    S = len(sides)
    parts = []
    for c in range(C):
        parts.append(side5[:, c:c + 1])
        parts.extend(others)
    fuse = jnp.concatenate(parts, axis=1)            # (N, C*S, H, W)
    fuse_g = fuse.reshape(N, C, S, H, W).astype(jnp.float32)
    w = weight.reshape(C, S).astype(jnp.float32)
    out = jnp.einsum('ncshw,cs->nchw', fuse_g, w)
    if bias is not None:
        out = out + bias.astype(jnp.float32)[None, :, None, None]
    return out


def _make_inputs(key, num_classes, num_sides, N, H, W, dtype):
    keys = jax.random.split(key, num_sides + 2)
    sides = [
        jax.random.normal(keys[i], (N, 1, H, W), dtype=jnp.float32).astype(dtype)
        for i in range(num_sides - 1)
    ]
    sides.append(
        jax.random.normal(keys[num_sides - 1], (N, num_classes, H, W),
                          dtype=jnp.float32).astype(dtype))
    weight = (jax.random.normal(keys[num_sides], (num_classes, num_sides),
                                dtype=jnp.float32) * 0.1).astype(dtype)
    bias = (jax.random.normal(keys[num_sides + 1], (num_classes,),
                              dtype=jnp.float32) * 0.1).astype(dtype)
    return sides, weight, bias


if __name__ == "__main__":
    key = jax.random.PRNGKey(0)
    k1, k2, k3, k4 = jax.random.split(key, 4)

    # Test 1: f32, HW multiple of 128; tile shrunk for >=4 grid steps.
    sides, weight, bias = _make_inputs(k1, num_classes=4, num_sides=4,
                                       N=2, H=16, W=16, dtype=jnp.float32)
    out = jax.block_until_ready(grouped_conv_fuse(sides, weight, bias))
    ref = grouped_conv_fuse_ref(sides, weight, bias)
    assert out.shape == (2, 4, 16, 16)
    assert jnp.allclose(out, ref, atol=1e-5, rtol=1e-5), "f32 mismatch"

    # Test 2: f32, HW NOT a multiple of 128 -> masked edge block, no pad/slice.
    sides2, weight2, bias2 = _make_inputs(k2, num_classes=5, num_sides=3,
                                          N=1, H=10, W=12, dtype=jnp.float32)
    out2 = jax.block_until_ready(grouped_conv_fuse(sides2, weight2, bias2))
    ref2 = grouped_conv_fuse_ref(sides2, weight2, bias2)
    assert out2.shape == (1, 5, 10, 12)
    assert jnp.allclose(out2, ref2, atol=1e-5, rtol=1e-5), "edge-block mismatch"

    # Test 3: bf16 I/O (HBM-bound savings on v5e/v6e), f32 accumulation inside.
    sides3, weight3, bias3 = _make_inputs(k3, num_classes=4, num_sides=4,
                                          N=2, H=16, W=16, dtype=jnp.bfloat16)
    out3 = jax.block_until_ready(grouped_conv_fuse(sides3, weight3, bias3))
    ref3 = grouped_conv_fuse_ref(sides3, weight3, bias3)
    assert out3.dtype == jnp.bfloat16
    assert jnp.allclose(out3.astype(jnp.float32), ref3, atol=2e-2, rtol=2e-2), \
        "bf16 mismatch"

    # Test 4: MXU offload path (v7x-oriented), CaseNet-like C, masked edge.
    sides4, weight4, bias4 = _make_inputs(k4, num_classes=19, num_sides=4,
                                          N=1, H=24, W=24, dtype=jnp.float32)
    out4 = jax.block_until_ready(
        grouped_conv_fuse(sides4, weight4, bias4, use_mxu=True))
    ref4 = grouped_conv_fuse_ref(sides4, weight4, bias4)
    assert out4.shape == (1, 19, 24, 24)
    assert jnp.allclose(out4, ref4, atol=1e-2, rtol=1e-2), "mxu-path mismatch"

    print("KERNEL_OK")
</pallas_src>

<mosaic_0001>
module attributes {stable_mosaic.version = 11 : i64} {
  func.func @kernel(%arg0: i32, %arg1: i32, %arg2: memref<1x4x128xf32, #tpu.memory_space<vmem>>, %arg3: memref<1x1x128xf32, #tpu.memory_space<vmem>>, %arg4: memref<1x1x128xf32, #tpu.memory_space<vmem>>, %arg5: memref<1x1x128xf32, #tpu.memory_space<vmem>>, %arg6: memref<4x4xf32, #tpu.memory_space<vmem>>, %arg7: memref<4x1xf32, #tpu.memory_space<vmem>>, %arg8: memref<1x4x128xf32, #tpu.memory_space<vmem>>) attributes {dimension_semantics = [#tpu.dimension_semantics<parallel>, #tpu.dimension_semantics<parallel>], iteration_bounds = array<i64: 2, 2>, scalar_prefetch = 0 : i64, scratch_operands = 0 : i64, tpu.core_type = #tpu.core_type<tc>, window_params = [{transform_indices = @transform_0, window_bounds = array<i64: 1, 4, 128>}, {transform_indices = @transform_1, window_bounds = array<i64: 1, 1, 128>}, {transform_indices = @transform_2, window_bounds = array<i64: 1, 1, 128>}, {transform_indices = @transform_3, window_bounds = array<i64: 1, 1, 128>}, {pipeline_mode = #tpu.pipeline_mode<synchronous>, transform_indices = @transform_4, window_bounds = array<i64: 4, 4>}, {pipeline_mode = #tpu.pipeline_mode<synchronous>, transform_indices = @transform_5, window_bounds = array<i64: 4, 1>}, {transform_indices = @transform_6, window_bounds = array<i64: 1, 4, 128>}]} {
    %c0 = arith.constant 0 : index
    %c0_0 = arith.constant 0 : index
    %0 = vector.load %arg6[%c0, %c0_0] : memref<4x4xf32, #tpu.memory_space<vmem>>, vector<4x4xf32>
    %c0_1 = arith.constant 0 : index
    %c0_2 = arith.constant 0 : index
    %1 = vector.load %arg7[%c0_1, %c0_2] : memref<4x1xf32, #tpu.memory_space<vmem>>, vector<4x1xf32>
    %c0_3 = arith.constant 0 : index
    %c0_4 = arith.constant 0 : index
    %c0_5 = arith.constant 0 : index
    %2 = vector.load %arg2[%c0_3, %c0_4, %c0_5] : memref<1x4x128xf32, #tpu.memory_space<vmem>>, vector<1x4x128xf32>
    %3 = vector.shape_cast %2 : vector<1x4x128xf32> to vector<4x128xf32>
    %4 = vector.extract_strided_slice %0 {offsets = [0, 0], sizes = [4, 1], strides = [1, 1]} : vector<4x4xf32> to vector<4x1xf32>
    %5 = vector.broadcast %4 : vector<4x1xf32> to vector<4x128xf32>
    %6 = arith.mulf %5, %3 : vector<4x128xf32>
    %7 = vector.broadcast %1 : vector<4x1xf32> to vector<4x128xf32>
    %8 = arith.addf %6, %7 : vector<4x128xf32>
    %c0_6 = arith.constant 0 : index
    %c0_7 = arith.constant 0 : index
    %c0_8 = arith.constant 0 : index
    %9 = vector.load %arg3[%c0_6, %c0_7, %c0_8] : memref<1x1x128xf32, #tpu.memory_space<vmem>>, vector<1x1x128xf32>
    %10 = vector.shape_cast %9 : vector<1x1x128xf32> to vector<1x128xf32>
    %11 = vector.extract_strided_slice %0 {offsets = [0, 1], sizes = [4, 1], strides = [1, 1]} : vector<4x4xf32> to vector<4x1xf32>
    %12 = vector.broadcast %11 : vector<4x1xf32> to vector<4x128xf32>
    %13 = vector.broadcast %10 : vector<1x128xf32> to vector<4x128xf32>
    %14 = arith.mulf %12, %13 : vector<4x128xf32>
    %15 = arith.addf %8, %14 : vector<4x128xf32>
    %c0_9 = arith.constant 0 : index
    %c0_10 = arith.constant 0 : index
    %c0_11 = arith.constant 0 : index
    %16 = vector.load %arg4[%c0_9, %c0_10, %c0_11] : memref<1x1x128xf32, #tpu.memory_space<vmem>>, vector<1x1x128xf32>
    %17 = vector.shape_cast %16 : vector<1x1x128xf32> to vector<1x128xf32>
    %18 = vector.extract_strided_slice %0 {offsets = [0, 2], sizes = [4, 1], strides = [1, 1]} : vector<4x4xf32> to vector<4x1xf32>
    %19 = vector.broadcast %18 : vector<4x1xf32> to vector<4x128xf32>
    %20 = vector.broadcast %17 : vector<1x128xf32> to vector<4x128xf32>
    %21 = arith.mulf %19, %20 : vector<4x128xf32>
    %22 = arith.addf %15, %21 : vector<4x128xf32>
    %c0_12 = arith.constant 0 : index
    %c0_13 = arith.constant 0 : index
    %c0_14 = arith.constant 0 : index
    %23 = vector.load %arg5[%c0_12, %c0_13, %c0_14] : memref<1x1x128xf32, #tpu.memory_space<vmem>>, vector<1x1x128xf32>
    %24 = vector.shape_cast %23 : vector<1x1x128xf32> to vector<1x128xf32>
    %25 = vector.extract_strided_slice %0 {offsets = [0, 3], sizes = [4, 1], strides = [1, 1]} : vector<4x4xf32> to vector<4x1xf32>
    %26 = vector.broadcast %25 : vector<4x1xf32> to vector<4x128xf32>
    %27 = vector.broadcast %24 : vector<1x128xf32> to vector<4x128xf32>
    %28 = arith.mulf %26, %27 : vector<4x128xf32>
    %29 = arith.addf %22, %28 : vector<4x128xf32>
    %c0_15 = arith.constant 0 : index
    %c0_16 = arith.constant 0 : index
    %c0_17 = arith.constant 0 : index
    %30 = vector.load %arg8[%c0_15, %c0_16, %c0_17] : memref<1x4x128xf32, #tpu.memory_space<vmem>>, vector<1x4x128xf32>
    %31 = vector.shape_cast %30 : vector<1x4x128xf32> to vector<4x128xf32>
    %32 = vector.shape_cast %29 : vector<4x128xf32> to vector<1x4x128xf32>
    tpu.vector_store %arg8[%c0_15, %c0_16, %c0_17], %32 {strides = array<i32>} : memref<1x4x128xf32, #tpu.memory_space<vmem>>, vector<1x4x128xf32>,
    return
  }
  func.func @transform_0(%arg0: i32, %arg1: i32) -> (i32, i32, i32) {
    %c0_i32 = arith.constant 0 : i32
    %c0_i32_0 = arith.constant 0 : i32
    return %arg0, %c0_i32, %arg1 : i32, i32, i32
  }
  func.func @transform_1(%arg0: i32, %arg1: i32) -> (i32, i32, i32) {
    %c0_i32 = arith.constant 0 : i32
    %c0_i32_0 = arith.constant 0 : i32
    return %arg0, %c0_i32, %arg1 : i32, i32, i32
  }
  func.func @transform_2(%arg0: i32, %arg1: i32) -> (i32, i32, i32) {
    %c0_i32 = arith.constant 0 : i32
    %c0_i32_0 = arith.constant 0 : i32
    return %arg0, %c0_i32, %arg1 : i32, i32, i32
  }
  func.func @transform_3(%arg0: i32, %arg1: i32) -> (i32, i32, i32) {
    %c0_i32 = arith.constant 0 : i32
    %c0_i32_0 = arith.constant 0 : i32
    return %arg0, %c0_i32, %arg1 : i32, i32, i32
  }
  func.func @transform_4(%arg0: i32, %arg1: i32) -> (i32, i32) {
    %c0_i32 = arith.constant 0 : i32
    %c0_i32_0 = arith.constant 0 : i32
    %c0_i32_1 = arith.constant 0 : i32
    return %c0_i32, %c0_i32_0 : i32, i32
  }
  func.func @transform_5(%arg0: i32, %arg1: i32) -> (i32, i32) {
    %c0_i32 = arith.constant 0 : i32
    %c0_i32_0 = arith.constant 0 : i32
    %c0_i32_1 = arith.constant 0 : i32
    return %c0_i32, %c0_i32_0 : i32, i32
  }
  func.func @transform_6(%arg0: i32, %arg1: i32) -> (i32, i32, i32) {
    %c0_i32 = arith.constant 0 : i32
    %c0_i32_0 = arith.constant 0 : i32
    return %arg0, %c0_i32, %arg1 : i32, i32, i32
  }
}

</mosaic_0001>

<llo_original>
// kernel: tpu_custom_call.1
$region0: #{tpu_custom_call.1}
  #allocation0 [shape = 'u32[]', space=smem, size = 0x4, offset = 0x4, fixed_abs, tag = 'smem constant byte address 0x4 - core index']
  #allocation1 [shape = 'u32[144,128]{1,0:T(1,128)}', space=vmem, size = 0x12000, scoped, tag = 'internal scratch']
  %s0 = inlined_call_operand.hbm [shape: f32[2,4,256], index: 0, kind: input, shape index: {}]
  %s1 = inlined_call_operand.vmem [shape: f32[2,1,256], index: 1, kind: input, shape index: {}]
  %s2 = inlined_call_operand.vmem [shape: f32[2,1,256], index: 2, kind: input, shape index: {}]
  %s3 = inlined_call_operand.hbm [shape: f32[2,1,256], index: 3, kind: input, shape index: {}]
  %s4 = inlined_call_operand.vmem [shape: f32[4,4], index: 4, kind: input, shape index: {}]
  %s5 = inlined_call_operand.vmem [shape: f32[4,1], index: 5, kind: input, shape index: {}]
  %s6 = inlined_call_operand.hbm [shape: f32[2,4,256], index: 6, kind: output, shape index: {}]
  %s7 = sld [smem:[#allocation0]]
  $region65: #{tpu_custom_call.1} parent=0
    _
  %s9 = ssub.s32 1, %s7
  %s10 = scalar_select 0, %s9, %s7
  $region1: #{tpu_custom_call.1} parent=0
    #allocation2 [shape = 'u8[4096]{0}', space=vmem, size = 0x1000, scoped, tag = 'input window, operand 0']
    #allocation3 [shape = 's32[2]{0}', space=sflag, size = 0x8, scoped, tag = 'scoped memory for tpu_custom_call.1']
    #allocation4 [shape = 's32[2]{0}', space=sflag, size = 0x8, scoped, tag = 'scoped memory for tpu_custom_call.1']
    #allocation5 [shape = 'u8[1024]{0}', space=vmem, size = 0x400, scoped, tag = 'input window, operand 3']
    #allocation6 [shape = 's32[2]{0}', space=sflag, size = 0x8, scoped, tag = 'scoped memory for tpu_custom_call.1']
    #allocation7 [shape = 'u8[4096]{0}', space=vmem, size = 0x1000, scoped, tag = 'output window, operand 0']
    %11 = vsyncpa [#allocation3], 0
    %s12 = scalar_lea.sflag [#allocation3], 1
    %13 = vsyncpa %s12, 0
    %14 = vsyncpa [#allocation6], 0
    %s15 = scalar_lea.sflag [#allocation6], 1
    %16 = vsyncpa %s15, 0
    %17 = vsyncpa [#allocation4], 0
    %s18 = scalar_lea.sflag [#allocation4], 1
    %19 = vsyncpa %s18, 0
    loop: start=0, step=1, limit=6
    $region2: #{tpu_custom_call.1} parent=1 // loop_pre_header
      _
    $region3: #{tpu_custom_call.1} parent=1 // loop_header
      %s21 = sphi 0, %s25
      %p22 = scmp.ge.s32.totalorder %s21, 6
      %s28 = sphi 0, %s40
      %s29 = sphi 0, %s36
      %s30 = sphi 0, %s28
      %s31 = sphi 0, %s29
      %s32 = sphi 0, %s30
      %s33 = sphi 0, %s31
      %s45 = sphi 0, %s47
      %s48 = sphi 0, %s45
      %s49 = sphi 0, %s48
      %s65 = sphi 0, %s49
      %s73 = sphi 0, %s75
      %s76 = sphi 0, %s73
      %s77 = sphi 0, %s76
      %s93 = sphi 0, %s77
      %s101 = sphi 0, %s103
      %s104 = sphi 0, %s101
      %s105 = sphi 0, %s104
      %s121 = sphi 0, %s105
      %s129 = sphi 0, %s131
      %s132 = sphi 0, %s129
      %s133 = sphi 0, %s132
      %s149 = sphi 0, %s133
      %s153 = sphi 0, %s153
      %s155 = sphi 0, %s153
      %s156 = sphi 0, %s155
      %s170 = sphi 0, %s156
      %s174 = sphi 0, %s174
      %s176 = sphi 0, %s174
      %s177 = sphi 0, %s176
      %s191 = sphi 0, %s177
      %s199 = sphi 0, %s201
      %s202 = sphi 0, %s199
      %s203 = sphi 0, %s202
      %s219 = sphi 0, %s203
    $region4: #{tpu_custom_call.1} parent=1 // loop_header_branch
      %24 = sbr.rel (%p22) target = $region8
    $region5: #{tpu_custom_call.1} parent=1 // loop_body
      %s26 = ssub.s32 %s21, 1
      %s27 = ssub.s32 %s21, 2
      %s34 = sadd.s32 1, %s29
      %p35 = scmp.ge.s32.totalorder %s34, 2
      %s36 = scalar_select %p35, 0, %s34
      %s37 = sadd.s32 1, %s28
      %s38 = scalar_select %p35, %s37, %s28
      %p39 = scmp.ge.s32.totalorder %s38, 2
      %s40 = scalar_select %p39, 0, %s38
      %s41 = ssub.s32 %s28, %s40
      %s42 = ssub.s32 %s29, %s36
      %s43 = sor.u32 %s41, %s42
      %p44 = scmp.eq.s32.totalorder %s43, 0
      %s46 = sadd.s32 %s45, 1
      %s47 = scalar_select %p44, %s45, %s46
      %p50 = pneg %p44
      %p51 = scmp.eq.s32.totalorder %s21, 3
      %p52 = por %p50, %p51
      %p53 = scmp.ne.s32.totalorder %s45, %s48
      %p54 = scmp.eq.s32.totalorder %s21, 0
      %p55 = por %p53, %p54
      %p56 = scmp.ne.s32.totalorder %s45, %s48
      %p57 = scmp.eq.s32.totalorder %s26, 3
      %p58 = por %p56, %p57
      %p59 = scmp.ne.s32.totalorder %s48, %s49
      %p60 = scmp.eq.s32.totalorder %s26, 0
      %p61 = por %p59, %p60
      %p62 = scmp.ne.s32.totalorder %s48, %s49
      %p63 = scmp.eq.s32.totalorder %s27, 3
      %p64 = por %p62, %p63
      %p66 = scmp.ne.s32.totalorder %s49, %s65
      %p67 = scmp.eq.s32.totalorder %s27, 0
      %p68 = por %p66, %p67
      %s69 = ssub.s32 %s28, %s40
      %s70 = ssub.s32 %s29, %s36
      %s71 = sor.u32 %s69, %s70
      %p72 = scmp.eq.s32.totalorder %s71, 0
      %s74 = sadd.s32 %s73, 1
      %s75 = scalar_select %p72, %s73, %s74
      %p78 = pneg %p72
      %p79 = scmp.eq.s32.totalorder %s21, 3
      %p80 = por %p78, %p79
      %p81 = scmp.ne.s32.totalorder %s73, %s76
      %p82 = scmp.eq.s32.totalorder %s21, 0
      %p83 = por %p81, %p82
      %p84 = scmp.ne.s32.totalorder %s73, %s76
      %p85 = scmp.eq.s32.totalorder %s26, 3
      %p86 = por %p84, %p85
      %p87 = scmp.ne.s32.totalorder %s76, %s77
      %p88 = scmp.eq.s32.totalorder %s26, 0
      %p89 = por %p87, %p88
      %p90 = scmp.ne.s32.totalorder %s76, %s77
      %p91 = scmp.eq.s32.totalorder %s27, 3
      %p92 = por %p90, %p91
      %p94 = scmp.ne.s32.totalorder %s77, %s93
      %p95 = scmp.eq.s32.totalorder %s27, 0
      %p96 = por %p94, %p95
      %s97 = ssub.s32 %s28, %s40
      %s98 = ssub.s32 %s29, %s36
      %s99 = sor.u32 %s97, %s98
      %p100 = scmp.eq.s32.totalorder %s99, 0
      %s102 = sadd.s32 %s101, 1
      %s103 = scalar_select %p100, %s101, %s102
      %p106 = pneg %p100
      %p107 = scmp.eq.s32.totalorder %s21, 3
      %p108 = por %p106, %p107
      %p109 = scmp.ne.s32.totalorder %s101, %s104
      %p110 = scmp.eq.s32.totalorder %s21, 0
      %p111 = por %p109, %p110
      %p112 = scmp.ne.s32.totalorder %s101, %s104
      %p113 = scmp.eq.s32.totalorder %s26, 3
      %p114 = por %p112, %p113
      %p115 = scmp.ne.s32.totalorder %s104, %s105
      %p116 = scmp.eq.s32.totalorder %s26, 0
      %p117 = por %p115, %p116
      %p118 = scmp.ne.s32.totalorder %s104, %s105
      %p119 = scmp.eq.s32.totalorder %s27, 3
      %p120 = por %p118, %p119
      %p122 = scmp.ne.s32.totalorder %s105, %s121
      %p123 = scmp.eq.s32.totalorder %s27, 0
      %p124 = por %p122, %p123
      %s125 = ssub.s32 %s28, %s40
      %s126 = ssub.s32 %s29, %s36
      %s127 = sor.u32 %s125, %s126
      %p128 = scmp.eq.s32.totalorder %s127, 0
      %s130 = sadd.s32 %s129, 1
      %s131 = scalar_select %p128, %s129, %s130
      %p134 = pneg %p128
      %p135 = scmp.eq.s32.totalorder %s21, 3
      %p136 = por %p134, %p135
      %p137 = scmp.ne.s32.totalorder %s129, %s132
      %p138 = scmp.eq.s32.totalorder %s21, 0
      %p139 = por %p137, %p138
      %p140 = scmp.ne.s32.totalorder %s129, %s132
      %p141 = scmp.eq.s32.totalorder %s26, 3
      %p142 = por %p140, %p141
      %p143 = scmp.ne.s32.totalorder %s132, %s133
      %p144 = scmp.eq.s32.totalorder %s26, 0
      %p145 = por %p143, %p144
      %p146 = scmp.ne.s32.totalorder %s132, %s133
      %p147 = scmp.eq.s32.totalorder %s27, 3
      %p148 = por %p146, %p147
      %p150 = scmp.ne.s32.totalorder %s133, %s149
      %p151 = scmp.eq.s32.totalorder %s27, 0
      %p152 = por %p150, %p151
      %s154 = sadd.s32 %s153, 1
      %p157 = scmp.eq.s32.totalorder %s21, 3
      %p158 = scmp.ne.s32.totalorder %s153, %s155
      %p159 = scmp.eq.s32.totalorder %s21, 0
      %p160 = por %p158, %p159
      %p161 = scmp.ne.s32.totalorder %s153, %s155
      %p162 = scmp.eq.s32.totalorder %s26, 3
      %p163 = por %p161, %p162
      %p164 = scmp.ne.s32.totalorder %s155, %s156
      %p165 = scmp.eq.s32.totalorder %s26, 0
      %p166 = por %p164, %p165
      %p167 = scmp.ne.s32.totalorder %s155, %s156
      %p168 = scmp.eq.s32.totalorder %s27, 3
      %p169 = por %p167, %p168
      %p171 = scmp.ne.s32.totalorder %s156, %s170
      %p172 = scmp.eq.s32.totalorder %s27, 0
      %p173 = por %p171, %p172
      %s175 = sadd.s32 %s174, 1
      %p178 = scmp.eq.s32.totalorder %s21, 3
      %p179 = scmp.ne.s32.totalorder %s174, %s176
      %p180 = scmp.eq.s32.totalorder %s21, 0
      %p181 = por %p179, %p180
      %p182 = scmp.ne.s32.totalorder %s174, %s176
      %p183 = scmp.eq.s32.totalorder %s26, 3
      %p184 = por %p182, %p183
      %p185 = scmp.ne.s32.totalorder %s176, %s177
      %p186 = scmp.eq.s32.totalorder %s26, 0
      %p187 = por %p185, %p186
      %p188 = scmp.ne.s32.totalorder %s176, %s177
      %p189 = scmp.eq.s32.totalorder %s27, 3
      %p190 = por %p188, %p189
      %p192 = scmp.ne.s32.totalorder %s177, %s191
      %p193 = scmp.eq.s32.totalorder %s27, 0
      %p194 = por %p192, %p193
      %s195 = ssub.s32 %s28, %s40
      %s196 = ssub.s32 %s29, %s36
      %s197 = sor.u32 %s195, %s196
      %p198 = scmp.eq.s32.totalorder %s197, 0
      %s200 = sadd.s32 %s199, 1
      %s201 = scalar_select %p198, %s199, %s200
      %p204 = pneg %p198
      %p205 = scmp.eq.s32.totalorder %s21, 3
      %p206 = por %p204, %p205
      %p207 = scmp.ne.s32.totalorder %s199, %s202
      %p208 = scmp.eq.s32.totalorder %s21, 0
      %p209 = por %p207, %p208
      %p210 = scmp.ne.s32.totalorder %s199, %s202
      %p211 = scmp.eq.s32.totalorder %s26, 3
      %p212 = por %p210, %p211
      %p213 = scmp.ne.s32.totalorder %s202, %s203
      %p214 = scmp.eq.s32.totalorder %s26, 0
      %p215 = por %p213, %p214
      %p216 = scmp.ne.s32.totalorder %s202, %s203
      %p217 = scmp.eq.s32.totalorder %s27, 3
      %p218 = por %p216, %p217
      %p220 = scmp.ne.s32.totalorder %s203, %s219
      %p221 = scmp.eq.s32.totalorder %s27, 0
      %p222 = por %p220, %p221
      %p223 = scmp.le.s32.totalorder 1, %s21
      %p224 = scmp.lt.s32.totalorder %s21, 5
      %p225 = pnand %p223, %p224
      %p226 = pneg %p225
      // Predicated region
      $region9: #{tpu_custom_call.1} parent=5 // pred_check
        _
      $region10: #{tpu_custom_call.1} parent=5 // pred_check_branch
        %228 = sbr.rel (%p225) target = $region12
      $region11: #{tpu_custom_call.1} parent=5 // pred_region
        %s229 = ssub.s32 %s21, 1
        // Predicated region
        $region13: #{tpu_custom_call.1} parent=11 // pred_check
          %p230 = pneg %p166
        $region14: #{tpu_custom_call.1} parent=11 // pred_check_branch
          %232 = sbr.rel (%p230) target = $region16
        $region15: #{tpu_custom_call.1} parent=11 // pred_region
          _
        $region16: #{tpu_custom_call.1} parent=11 // pred_fallthru
          _
        // Predicated region
        $region17: #{tpu_custom_call.1} parent=11 // pred_check
          %p233 = pneg %p187
        $region18: #{tpu_custom_call.1} parent=11 // pred_check_branch
          %235 = sbr.rel (%p233) target = $region20
        $region19: #{tpu_custom_call.1} parent=11 // pred_region
          _
        $region20: #{tpu_custom_call.1} parent=11 // pred_fallthru
          _
      $region12: #{tpu_custom_call.1} parent=5 // pred_fallthru
        _
      %p236 = scmp.lt.s32.totalorder %s21, 4
      // Predicated region
      $region21: #{tpu_custom_call.1} parent=5 // pred_check
        %p237 = pneg %p236
      $region22: #{tpu_custom_call.1} parent=5 // pred_check_branch
        %239 = sbr.rel (%p237) target = $region24
      $region23: #{tpu_custom_call.1} parent=5 // pred_region
        // Predicated region
        $region25: #{tpu_custom_call.1} parent=23 // pred_check
          %p240 = pneg %p55
        $region26: #{tpu_custom_call.1} parent=23 // pred_check_branch
          %242 = sbr.rel (%p240) target = $region28
        $region27: #{tpu_custom_call.1} parent=23 // pred_region
          %s243 = sand.u32 %s45, 1
          %s244 = scalar_lea.sflag [#allocation3], %s243
          %s245 = sand.u32 %s45, 1
          %s246 = smul.addr %s245, 4
          %s247 = scalar_lea.vmem [#allocation2], %s246
          %s249 = ssub.s32 64, 64
          %250 = vsyncadd %s244, %s249
          %s251 = smul.addr %s28, 2
          %s252 = sadd.s32 %s29, %s251
          %s253 = smul.addr %s252, 64
          %s254 = scalar_lea.hbm %s0, %s253
          %s256 = sshll.u32 %s247, 4
          %s257 = int_to_ptr.vmem [resolvable:$true] %s256
          %259 = dma.hbm_to_vmem [thread:$0]  %s254, 64, %s257, %s244
        $region28: #{tpu_custom_call.1} parent=23 // pred_fallthru
          _
        // Predicated region
        $region29: #{tpu_custom_call.1} parent=23 // pred_check
          %p260 = pneg %p83
        $region30: #{tpu_custom_call.1} parent=23 // pred_check_branch
          %262 = sbr.rel (%p260) target = $region32
        $region31: #{tpu_custom_call.1} parent=23 // pred_region
          %p263 = scmp.lt.s32.totalorder %s28, 1
          %s264 = scalar_select %p263, %s28, 1
          %p265 = scmp.lt.s32.totalorder %s29, 1
          %s266 = scalar_select %p265, %s29, 1
          %s267 = smul.addr %s264, 2
          %s268 = sadd.s32 %s266, %s267
          %s269 = scalar_lea.vmem %s1, %s268
        $region32: #{tpu_custom_call.1} parent=23 // pred_fallthru
          _
        // Predicated region
        $region33: #{tpu_custom_call.1} parent=23 // pred_check
          %p270 = pneg %p111
        $region34: #{tpu_custom_call.1} parent=23 // pred_check_branch
          %272 = sbr.rel (%p270) target = $region36
        $region35: #{tpu_custom_call.1} parent=23 // pred_region
          %p273 = scmp.lt.s32.totalorder %s28, 1
          %s274 = scalar_select %p273, %s28, 1
          %p275 = scmp.lt.s32.totalorder %s29, 1
          %s276 = scalar_select %p275, %s29, 1
          %s277 = smul.addr %s274, 2
          %s278 = sadd.s32 %s276, %s277
          %s279 = scalar_lea.vmem %s2, %s278
        $region36: #{tpu_custom_call.1} parent=23 // pred_fallthru
          _
        // Predicated region
        $region37: #{tpu_custom_call.1} parent=23 // pred_check
          %p280 = pneg %p139
        $region38: #{tpu_custom_call.1} parent=23 // pred_check_branch
          %282 = sbr.rel (%p280) target = $region40
        $region39: #{tpu_custom_call.1} parent=23 // pred_region
          %s283 = sand.u32 %s129, 1
          %s284 = scalar_lea.sflag [#allocation6], %s283
          %s285 = sand.u32 %s129, 1
          %s286 = scalar_lea.vmem [#allocation5], %s285
          %s288 = ssub.s32 16, 16
          %289 = vsyncadd %s284, %s288
          %s290 = smul.addr %s28, 2
          %s291 = sadd.s32 %s29, %s290
          %s292 = smul.addr %s291, 16
          %s293 = scalar_lea.hbm %s3, %s292
          %s295 = sshll.u32 %s286, 4
          %s296 = int_to_ptr.vmem [resolvable:$true] %s295
          %298 = dma.hbm_to_vmem [thread:$0]  %s293, 16, %s296, %s284
        $region40: #{tpu_custom_call.1} parent=23 // pred_fallthru
          _
      $region24: #{tpu_custom_call.1} parent=5 // pred_fallthru
        _
      %p299 = scmp.le.s32.totalorder 1, %s21
      %p300 = scmp.lt.s32.totalorder %s21, 5
      %p301 = pnand %p299, %p300
      %p302 = pneg %p301
      // Predicated region
      $region41: #{tpu_custom_call.1} parent=5 // pred_check
        _
      $region42: #{tpu_custom_call.1} parent=5 // pred_check_branch
        %304 = sbr.rel (%p301) target = $region44
      $region43: #{tpu_custom_call.1} parent=5 // pred_region
        %s305 = ssub.s32 %s21, 1
        %s306 = sand.u32 %s48, 1
        %s307 = scalar_lea.sflag [#allocation3], %s306
        %s308 = sand.u32 %s48, 1
        %s309 = smul.addr %s308, 4
        %s310 = scalar_lea.vmem [#allocation2], %s309
        // Predicated region
        $region45: #{tpu_custom_call.1} parent=43 // pred_check
          %p311 = pneg %p61
        $region46: #{tpu_custom_call.1} parent=43 // pred_check_branch
          %313 = sbr.rel (%p311) target = $region48
        $region47: #{tpu_custom_call.1} parent=43 // pred_region
          %314 = dma.done %s307, 64
        $region48: #{tpu_custom_call.1} parent=43 // pred_fallthru
          _
        %s315 = sand.u32 %s132, 1
        %s316 = scalar_lea.sflag [#allocation6], %s315
        %s317 = sand.u32 %s132, 1
        %s318 = scalar_lea.vmem [#allocation5], %s317
        // Predicated region
        $region49: #{tpu_custom_call.1} parent=43 // pred_check
          %p319 = pneg %p145
        $region50: #{tpu_custom_call.1} parent=43 // pred_check_branch
          %321 = sbr.rel (%p319) target = $region52
        $region51: #{tpu_custom_call.1} parent=43 // pred_region
          %322 = dma.done %s316, 16
        $region52: #{tpu_custom_call.1} parent=43 // pred_fallthru
          _
        %s323 = sand.u32 %s48, 1
        %s324 = scalar_lea.sflag [#allocation3], %s323
        %s325 = sand.u32 %s48, 1
        %s326 = smul.addr %s325, 4
        %s327 = scalar_lea.vmem [#allocation2], %s326
        %p328 = pneg %p61
        %p329 = pneg %p58
        %p330 = scmp.lt.s32.totalorder %s30, 1
        %s331 = scalar_select %p330, %s30, 1
        %p332 = scmp.lt.s32.totalorder %s31, 1
        %s333 = scalar_select %p332, %s31, 1
        %s334 = smul.addr %s331, 2
        %s335 = sadd.s32 %s333, %s334
        %s336 = scalar_lea.vmem %s1, %s335
        %p337 = pneg %p89
        %p338 = pneg %p86
        %p339 = scmp.lt.s32.totalorder %s30, 1
        %s340 = scalar_select %p339, %s30, 1
        %p341 = scmp.lt.s32.totalorder %s31, 1
        %s342 = scalar_select %p341, %s31, 1
        %s343 = smul.addr %s340, 2
        %s344 = sadd.s32 %s342, %s343
        %s345 = scalar_lea.vmem %s2, %s344
        %p346 = pneg %p117
        %p347 = pneg %p114
        %s348 = sand.u32 %s132, 1
        %s349 = scalar_lea.sflag [#allocation6], %s348
        %s350 = sand.u32 %s132, 1
        %s351 = scalar_lea.vmem [#allocation5], %s350
        %p352 = pneg %p145
        %p353 = pneg %p142
        %p354 = pneg %p166
        %p355 = pneg %p163
        %p356 = pneg %p187
        %p357 = pneg %p184
        %p358 = pneg %p215
        %p359 = pneg %p212
        %s360 = sand.u32 %s202, 1
        %s361 = scalar_lea.sflag [#allocation4], %s360
        %s362 = sand.u32 %s202, 1
        %s363 = smul.addr %s362, 4
        %s364 = scalar_lea.vmem [#allocation7], %s363
        %p365 = scmp.lt.s32.totalorder %s30, 1
        %s366 = scalar_select %p365, %s30, 1
        %p367 = scmp.lt.s32.totalorder %s31, 1
        %s368 = scalar_select %p367, %s31, 1
        %s369 = smul.addr %s366, 2
        %s370 = sadd.s32 %s368, %s369
        %s371 = scalar_lea.vmem %s1, %s370
        %p372 = scmp.lt.s32.totalorder %s30, 1
        %s373 = scalar_select %p372, %s30, 1
        %p374 = scmp.lt.s32.totalorder %s31, 1
        %s375 = scalar_select %p374, %s31, 1
        %s376 = smul.addr %s373, 2
        %s377 = sadd.s32 %s375, %s376
        %s378 = scalar_lea.vmem %s2, %s377
        %v379 = vld [vmem:[%s4] sm:$0xf]
        %v380 = vld [vmem:[%s5] sm:$0xf]
        %v381 = vld [vmem:[%s310] sm:$0xf]
        %383 = vset.pattern.permute.xlu0 0
        %384 = vperm.xlu0 %383, %v379
        %v385 = vpop.permute.xlu0 %384
        %v387 = vmul.f32 %v385, %v381
        %389 = vset.pattern.permute.xlu0 0
        %390 = vperm.xlu0 %389, %v380
        %v391 = vpop.permute.xlu0 %390
        %v393 = vadd.f32 %v387, %v391
        %v394 = vld [vmem:[%s371] sm:$0x1]
        %395 = vset.pattern.permute.xlu0 1
        %396 = vperm.xlu0 %395, %v379
        %v397 = vpop.permute.xlu0 %396
        %v400 = vlaneseq
        %v401 = vshrl.u32 %v400, 7
        %v402 = vsub.s32 0, %v401
        %v403 = vrot.slane %v394, %v402
        %v405 = vmul.f32 %v397, %v403
        %v406 = vadd.f32 %v393, %v405
        %v407 = vld [vmem:[%s378] sm:$0x1]
        %408 = vset.pattern.permute.xlu0 2
        %409 = vperm.xlu0 %408, %v379
        %v410 = vpop.permute.xlu0 %409
        %v413 = vlaneseq
        %v414 = vshrl.u32 %v413, 7
        %v415 = vsub.s32 0, %v414
        %v416 = vrot.slane %v407, %v415
        %v418 = vmul.f32 %v410, %v416
        %v419 = vadd.f32 %v406, %v418
        %v420 = vld [vmem:[%s318] sm:$0x1]
        %421 = vset.pattern.permute.xlu0 3
        %422 = vperm.xlu0 %421, %v379
        %v423 = vpop.permute.xlu0 %422
        %v426 = vlaneseq
        %v427 = vshrl.u32 %v426, 7
        %v428 = vsub.s32 0, %v427
        %v429 = vrot.slane %v420, %v428
        %v431 = vmul.f32 %v423, %v429
        %v432 = vadd.f32 %v419, %v431
        %433 = vst [vmem:[%s364] sm:$0xf] %v432
        %s434 = sand.u32 %s202, 1
        %s435 = scalar_lea.sflag [#allocation4], %s434
        %s436 = sand.u32 %s202, 1
        %s437 = smul.addr %s436, 4
        %s438 = scalar_lea.vmem [#allocation7], %s437
        // Predicated region
        $region53: #{tpu_custom_call.1} parent=43 // pred_check
          %p439 = pneg %p212
        $region54: #{tpu_custom_call.1} parent=43 // pred_check_branch
          %441 = sbr.rel (%p439) target = $region56
        $region55: #{tpu_custom_call.1} parent=43 // pred_region
          %s443 = ssub.s32 64, 64
          %444 = vsyncadd %s435, %s443
          %s445 = smul.addr %s30, 2
          %s446 = sadd.s32 %s31, %s445
          %s447 = smul.addr %s446, 64
          %s448 = scalar_lea.hbm %s6, %s447
          %s450 = sshll.u32 %s438, 4
          %s451 = int_to_ptr.vmem [resolvable:$true] %s450
          %453 = dma.vmem_to_hbm [thread:$0]  %s451, 64, %s448, %s435
        $region56: #{tpu_custom_call.1} parent=43 // pred_fallthru
          _
      $region44: #{tpu_custom_call.1} parent=5 // pred_fallthru
        _
      %p454 = scmp.le.s32.totalorder 2, %s21
      // Predicated region
      $region57: #{tpu_custom_call.1} parent=5 // pred_check
        %p455 = pneg %p454
      $region58: #{tpu_custom_call.1} parent=5 // pred_check_branch
        %457 = sbr.rel (%p455) target = $region60
      $region59: #{tpu_custom_call.1} parent=5 // pred_region
        %s458 = ssub.s32 %s21, 2
        // Predicated region
        $region61: #{tpu_custom_call.1} parent=59 // pred_check
          %p459 = pneg %p218
        $region62: #{tpu_custom_call.1} parent=59 // pred_check_branch
          %461 = sbr.rel (%p459) target = $region64
        $region63: #{tpu_custom_call.1} parent=59 // pred_region
          %s462 = sand.u32 %s203, 1
          %s463 = scalar_lea.sflag [#allocation4], %s462
          %s464 = sand.u32 %s203, 1
          %s465 = smul.addr %s464, 4
          %s466 = scalar_lea.vmem [#allocation7], %s465
          %467 = dma.done %s463, 64
        $region64: #{tpu_custom_call.1} parent=59 // pred_fallthru
          _
      $region60: #{tpu_custom_call.1} parent=5 // pred_fallthru
        _
    $region6: #{tpu_custom_call.1} parent=1 // loop_footer
      %s25 = sadd.s32 1, %s21
    $region7: #{tpu_custom_call.1} parent=1 // loop_footer_branch
      %20 = sbr.rel target = $region3
    $region8: #{tpu_custom_call.1} parent=1 // loop_exit
      _
    %468 = vsyncpa [#allocation3], 1
    %s469 = scalar_lea.sflag [#allocation3], 1
    %470 = vsyncpa %s469, 1
    %471 = vsyncpa [#allocation6], 1
    %s472 = scalar_lea.sflag [#allocation6], 1
    %473 = vsyncpa %s472, 1
    %474 = vsyncpa [#allocation4], 1
    %s475 = scalar_lea.sflag [#allocation4], 1
    %476 = vsyncpa %s475, 1

</llo_original>
